<compile_context>
chip_gen: v7x
topology: tpu7x:2x2x1
jax: 0.10.0
libtpu: 0.0.40
codegen_flags: <defaults>
</compile_context>

<pallas_src>
import functools
import math

import numpy as np

import jax
import jax.numpy as jnp
from jax import lax
from jax.experimental import pallas as pl
from jax.experimental.pallas import tpu as pltpu

SIGMA_DATA = 0.5


def _precond_kernel(x_ref, sigma_ref, ftab_ref, w1_ref, wt_ref, b1_ref,
                    w2_ref, b2_ref, out_ref, *, sigma_data):
    # x_ref:    (TB, D)   batch tile of x
    # sigma_ref:(TB, 1)   per-sample sigma
    # ftab_ref: (2, E)    row 0 = [freqs, freqs], row 1 = [0, pi/2] phase table
    # w1_ref:   (D, H), wt_ref: (E, H), b1_ref: (1, H)
    # w2_ref:   (H, D), b2_ref: (1, D)
    x = x_ref[...].astype(jnp.float32)
    sigma = sigma_ref[...].astype(jnp.float32)              # (TB, 1)

    # --- preconditioning coefficients (rsqrt -> EUP, no full-precision divide)
    sd2 = jnp.float32(sigma_data * sigma_data)
    denom = sigma * sigma + sd2                              # sigma^2 + sd^2
    inv_sqrt = lax.rsqrt(denom)                              # 1/sqrt(denom)
    c_in = inv_sqrt
    c_out = sigma * jnp.float32(sigma_data) * inv_sqrt
    c_skip = sd2 * (inv_sqrt * inv_sqrt)                     # sd2 / denom

    # --- c_noise and its sinusoidal embedding.
    # temb = [sin(ang), cos(ang)] is produced as one sin() of a phase-shifted
    # angle (cos(a) == sin(a + pi/2)), so there is no sin/cos concatenation and
    # therefore no cross-lane shuffle or materialized copy.
    c_noise = jnp.log(sigma) * jnp.float32(0.25)             # (TB, 1)
    ftab = ftab_ref[...]                                     # (2, E), constant
    ang = c_noise * ftab[0:1, :] + ftab[1:2, :]              # (TB, E)
    temb = jnp.sin(ang)

    # --- MLP denoiser: two small MXU passes (no merged-K concat needed).
    xin = c_in * x
    h = (jnp.dot(xin, w1_ref[...], preferred_element_type=jnp.float32)
         + jnp.dot(temb, wt_ref[...], preferred_element_type=jnp.float32)
         + b1_ref[...])
    h = h * jax.nn.sigmoid(h)                                # SiLU
    f_x = jnp.dot(h, w2_ref[...],
                  preferred_element_type=jnp.float32) + b2_ref[...]

    # --- D_x = c_skip * x + c_out * F_x
    out_ref[...] = c_skip * x + c_out * f_x


def _pick_batch_tile(B: int) -> int:
    """Batch tile: single tile for tiny B, otherwise >=2 grid steps (v7x
    megacore) with 8-row-aligned tiles capped at 1024 rows."""
    if B <= 16:
        return B
    tb = (((B + 1) // 2) + 7) // 8 * 8      # round_up(ceil(B/2), 8)
    return min(tb, 1024)


@functools.partial(jax.jit, static_argnames=("sigma_data", "tb"))
def precond_forward(x, sigma, params, *, sigma_data=SIGMA_DATA, tb=None):
    """Pallas implementation of Precond.forward with a bound MLP denoiser."""
    x = x.astype(jnp.float32)
    sigma = sigma.astype(jnp.float32).reshape(-1, 1)         # (B, 1)
    B, D = x.shape

    w1, wt, b1, w2, b2 = params
    E, H = wt.shape
    assert E % 2 == 0, "time-embedding width must be even"
    assert w1.shape == (D, H)

    # Static sinusoidal frequency/phase table (computed once, host-side).
    half = E // 2
    freqs = np.exp(-math.log(10000.0)
                   * np.arange(half, dtype=np.float64) / half)
    ftab_np = np.stack([
        np.concatenate([freqs, freqs]),                       # freqs2
        np.concatenate([np.zeros(half), np.full(half, math.pi / 2.0)]),
    ]).astype(np.float32)                                     # (2, E)
    ftab = jnp.asarray(ftab_np)

    if tb is None:
        tb = _pick_batch_tile(B)
    grid = pl.cdiv(B, tb)
    # NOTE: no batch padding / jnp.pad copy — a ragged last tile is handled by
    # Pallas partial edge blocks (all compute here is per-row, so garbage rows
    # never contaminate valid rows, and their stores are dropped).

    kernel = functools.partial(_precond_kernel, sigma_data=float(sigma_data))

    out = pl.pallas_call(
        kernel,
        out_shape=jax.ShapeDtypeStruct((B, D), jnp.float32),
        grid_spec=pltpu.PrefetchScalarGridSpec(
            num_scalar_prefetch=0,
            grid=(grid,),
            in_specs=[
                pl.BlockSpec((tb, D), lambda i: (i, 0)),      # x tile
                pl.BlockSpec((tb, 1), lambda i: (i, 0)),      # sigma tile
                # Grid-invariant (resident) constants / weights / biases:
                pl.BlockSpec((2, E), lambda i: (0, 0)),       # freq/phase tab
                pl.BlockSpec((D, H), lambda i: (0, 0)),       # W1
                pl.BlockSpec((E, H), lambda i: (0, 0)),       # Wt
                pl.BlockSpec((1, H), lambda i: (0, 0)),       # b1
                pl.BlockSpec((H, D), lambda i: (0, 0)),       # W2
                pl.BlockSpec((1, D), lambda i: (0, 0)),       # b2
            ],
            out_specs=pl.BlockSpec((tb, D), lambda i: (i, 0)),
        ),
        compiler_params=pltpu.CompilerParams(
            dimension_semantics=("parallel",)),
    )(x, sigma, ftab, w1.astype(jnp.float32), wt.astype(jnp.float32),
      b1.astype(jnp.float32), w2.astype(jnp.float32), b2.astype(jnp.float32))
    return out


def precond_reference(x, sigma, params, *, sigma_data=SIGMA_DATA):
    """Pure-JAX reference mirroring the PyTorch Precond.forward semantics."""
    x = x.astype(jnp.float32)
    sigma = sigma.astype(jnp.float32).reshape(-1, 1)
    w1, wt, b1, w2, b2 = params
    E = wt.shape[0]

    c_skip = sigma_data ** 2 / (sigma ** 2 + sigma_data ** 2)
    c_out = sigma * sigma_data / jnp.sqrt(sigma ** 2 + sigma_data ** 2)
    c_in = 1.0 / jnp.sqrt(sigma_data ** 2 + sigma ** 2)
    c_noise = jnp.log(sigma) / 4.0
    x_in = c_in * x

    half = E // 2
    freqs = jnp.exp(-math.log(10000.0)
                    * jnp.arange(half, dtype=jnp.float32) / half)
    ang = c_noise * freqs[None, :]
    temb = jnp.concatenate([jnp.sin(ang), jnp.cos(ang)], axis=-1)

    h = x_in @ w1 + temb @ wt + b1
    h = h * jax.nn.sigmoid(h)
    f_x = h @ w2 + b2
    return c_skip * x + c_out * f_x


def make_params(key, hid_dim, mlp_hidden, emb_dim):
    k1, k2, k3 = jax.random.split(key, 3)
    w1 = jax.random.normal(k1, (hid_dim, mlp_hidden), jnp.float32) * 0.05
    wt = jax.random.normal(k2, (emb_dim, mlp_hidden), jnp.float32) * 0.05
    b1 = jnp.zeros((1, mlp_hidden), jnp.float32)
    w2 = jax.random.normal(k3, (mlp_hidden, hid_dim), jnp.float32) * 0.05
    b2 = jnp.zeros((1, hid_dim), jnp.float32)
    return (w1, wt, b1, w2, b2)


if __name__ == "__main__":
    B = 48          # batch (two grid steps with tb=24; exercises multi-tile path)
    HID_DIM = 32    # embedded data dimension (Precond.hid_dim)
    MLP_H = 64      # denoiser hidden width
    EMB = 16        # time-embedding width

    key = jax.random.PRNGKey(0)
    kx, ks, kp = jax.random.split(key, 3)
    x = jax.random.normal(kx, (B, HID_DIM), jnp.float32)
    sigma = jnp.exp(jax.random.uniform(ks, (B,), jnp.float32,
                                       minval=-1.2, maxval=1.2))  # positive
    params = make_params(kp, HID_DIM, MLP_H, EMB)

    out = precond_forward(x, sigma, params)
    out = jax.block_until_ready(out)

    ref = precond_reference(x, sigma, params)
    assert out.shape == (B, HID_DIM) and out.dtype == jnp.float32
    assert jnp.allclose(out, ref, atol=1e-4, rtol=1e-4), "mismatch vs reference"

    print("KERNEL_OK")
</pallas_src>

<mosaic_0001>
module attributes {stable_mosaic.version = 11 : i64} {
  func.func @_precond_kernel(%arg0: i32, %arg1: memref<24x32xf32, #tpu.memory_space<vmem>>, %arg2: memref<24x1xf32, #tpu.memory_space<vmem>>, %arg3: memref<2x16xf32, #tpu.memory_space<vmem>>, %arg4: memref<32x64xf32, #tpu.memory_space<vmem>>, %arg5: memref<16x64xf32, #tpu.memory_space<vmem>>, %arg6: memref<1x64xf32, #tpu.memory_space<vmem>>, %arg7: memref<64x32xf32, #tpu.memory_space<vmem>>, %arg8: memref<1x32xf32, #tpu.memory_space<vmem>>, %arg9: memref<24x32xf32, #tpu.memory_space<vmem>>) attributes {dimension_semantics = [#tpu.dimension_semantics<parallel>], iteration_bounds = array<i64: 2>, scalar_prefetch = 0 : i64, scratch_operands = 0 : i64, tpu.core_type = #tpu.core_type<tc>, window_params = [{transform_indices = @transform_0, window_bounds = array<i64: 24, 32>}, {transform_indices = @transform_1, window_bounds = array<i64: 24, 1>}, {pipeline_mode = #tpu.pipeline_mode<synchronous>, transform_indices = @transform_2, window_bounds = array<i64: 2, 16>}, {pipeline_mode = #tpu.pipeline_mode<synchronous>, transform_indices = @transform_3, window_bounds = array<i64: 32, 64>}, {pipeline_mode = #tpu.pipeline_mode<synchronous>, transform_indices = @transform_4, window_bounds = array<i64: 16, 64>}, {pipeline_mode = #tpu.pipeline_mode<synchronous>, transform_indices = @transform_5, window_bounds = array<i64: 1, 64>}, {pipeline_mode = #tpu.pipeline_mode<synchronous>, transform_indices = @transform_6, window_bounds = array<i64: 64, 32>}, {pipeline_mode = #tpu.pipeline_mode<synchronous>, transform_indices = @transform_7, window_bounds = array<i64: 1, 32>}, {transform_indices = @transform_8, window_bounds = array<i64: 24, 32>}]} {
    %c0 = arith.constant 0 : index
    %c0_0 = arith.constant 0 : index
    %0 = vector.load %arg1[%c0, %c0_0] : memref<24x32xf32, #tpu.memory_space<vmem>>, vector<24x32xf32>
    %c0_1 = arith.constant 0 : index
    %c0_2 = arith.constant 0 : index
    %1 = vector.load %arg2[%c0_1, %c0_2] : memref<24x1xf32, #tpu.memory_space<vmem>>, vector<24x1xf32>
    %2 = arith.mulf %1, %1 : vector<24x1xf32>
    %cst = arith.constant 2.500000e-01 : f32
    %3 = vector.broadcast %cst : f32 to vector<24x1xf32>
    %4 = arith.addf %2, %3 : vector<24x1xf32>
    %5 = math.rsqrt %4 : vector<24x1xf32>
    %cst_3 = arith.constant 5.000000e-01 : f32
    %6 = vector.broadcast %cst_3 : f32 to vector<24x1xf32>
    %7 = arith.mulf %1, %6 : vector<24x1xf32>
    %8 = arith.mulf %7, %5 : vector<24x1xf32>
    %9 = arith.mulf %5, %5 : vector<24x1xf32>
    %cst_4 = arith.constant 2.500000e-01 : f32
    %10 = vector.broadcast %cst_4 : f32 to vector<24x1xf32>
    %11 = arith.mulf %10, %9 : vector<24x1xf32>
    %12 = math.log %1 : vector<24x1xf32>
    %cst_5 = arith.constant 2.500000e-01 : f32
    %13 = vector.broadcast %cst_5 : f32 to vector<24x1xf32>
    %14 = arith.mulf %12, %13 : vector<24x1xf32>
    %c0_6 = arith.constant 0 : index
    %c0_7 = arith.constant 0 : index
    %15 = vector.load %arg3[%c0_6, %c0_7] : memref<2x16xf32, #tpu.memory_space<vmem>>, vector<2x16xf32>
    %16 = vector.extract_strided_slice %15 {offsets = [0, 0], sizes = [1, 16], strides = [1, 1]} : vector<2x16xf32> to vector<1x16xf32>
    %17 = vector.broadcast %14 : vector<24x1xf32> to vector<24x16xf32>
    %18 = vector.broadcast %16 : vector<1x16xf32> to vector<24x16xf32>
    %19 = arith.mulf %17, %18 : vector<24x16xf32>
    %20 = vector.extract_strided_slice %15 {offsets = [1, 0], sizes = [1, 16], strides = [1, 1]} : vector<2x16xf32> to vector<1x16xf32>
    %21 = vector.broadcast %20 : vector<1x16xf32> to vector<24x16xf32>
    %22 = arith.addf %19, %21 : vector<24x16xf32>
    %23 = math.sin %22 : vector<24x16xf32>
    %24 = vector.broadcast %5 : vector<24x1xf32> to vector<24x32xf32>
    %25 = arith.mulf %24, %0 : vector<24x32xf32>
    %c0_8 = arith.constant 0 : index
    %c0_9 = arith.constant 0 : index
    %26 = vector.load %arg4[%c0_8, %c0_9] : memref<32x64xf32, #tpu.memory_space<vmem>>, vector<32x64xf32>
    %cst_10 = arith.constant dense<0.000000e+00> : vector<24x64xf32>
    %27 = tpu.matmul %25, %26, %cst_10 {dimension_numbers = #tpu.dot_dimension_numbers<[1], [0], [0], [1], [0, 0, 1, 1], [], []>} : vector<24x32xf32>, vector<32x64xf32>, vector<24x64xf32> -> vector<24x64xf32>
    %c0_11 = arith.constant 0 : index
    %c0_12 = arith.constant 0 : index
    %28 = vector.load %arg5[%c0_11, %c0_12] : memref<16x64xf32, #tpu.memory_space<vmem>>, vector<16x64xf32>
    %cst_13 = arith.constant dense<0.000000e+00> : vector<24x64xf32>
    %29 = tpu.matmul %23, %28, %cst_13 {dimension_numbers = #tpu.dot_dimension_numbers<[1], [0], [0], [1], [0, 0, 1, 1], [], []>} : vector<24x16xf32>, vector<16x64xf32>, vector<24x64xf32> -> vector<24x64xf32>
    %30 = arith.addf %27, %29 : vector<24x64xf32>
    %c0_14 = arith.constant 0 : index
    %c0_15 = arith.constant 0 : index
    %31 = vector.load %arg6[%c0_14, %c0_15] : memref<1x64xf32, #tpu.memory_space<vmem>>, vector<1x64xf32>
    %32 = vector.broadcast %31 : vector<1x64xf32> to vector<24x64xf32>
    %33 = arith.addf %30, %32 : vector<24x64xf32>
    %34 = arith.negf %33 : vector<24x64xf32>
    %35 = math.exp %34 : vector<24x64xf32>
    %cst_16 = arith.constant 1.000000e+00 : f32
    %36 = vector.broadcast %cst_16 : f32 to vector<24x64xf32>
    %37 = arith.addf %36, %35 : vector<24x64xf32>
    %38 = arith.divf %36, %37 : vector<24x64xf32>
    %39 = arith.mulf %33, %38 : vector<24x64xf32>
    %c0_17 = arith.constant 0 : index
    %c0_18 = arith.constant 0 : index
    %40 = vector.load %arg7[%c0_17, %c0_18] : memref<64x32xf32, #tpu.memory_space<vmem>>, vector<64x32xf32>
    %cst_19 = arith.constant dense<0.000000e+00> : vector<24x32xf32>
    %41 = tpu.matmul %39, %40, %cst_19 {dimension_numbers = #tpu.dot_dimension_numbers<[1], [0], [0], [1], [0, 0, 1, 1], [], []>} : vector<24x64xf32>, vector<64x32xf32>, vector<24x32xf32> -> vector<24x32xf32>
    %c0_20 = arith.constant 0 : index
    %c0_21 = arith.constant 0 : index
    %42 = vector.load %arg8[%c0_20, %c0_21] : memref<1x32xf32, #tpu.memory_space<vmem>>, vector<1x32xf32>
    %43 = vector.broadcast %42 : vector<1x32xf32> to vector<24x32xf32>
    %44 = arith.addf %41, %43 : vector<24x32xf32>
    %45 = vector.broadcast %11 : vector<24x1xf32> to vector<24x32xf32>
    %46 = arith.mulf %45, %0 : vector<24x32xf32>
    %47 = vector.broadcast %8 : vector<24x1xf32> to vector<24x32xf32>
    %48 = arith.mulf %47, %44 : vector<24x32xf32>
    %49 = arith.addf %46, %48 : vector<24x32xf32>
    %c0_22 = arith.constant 0 : index
    %c0_23 = arith.constant 0 : index
    %50 = vector.load %arg9[%c0_22, %c0_23] : memref<24x32xf32, #tpu.memory_space<vmem>>, vector<24x32xf32>
    tpu.vector_store %arg9[%c0_22, %c0_23], %49 {strides = array<i32>} : memref<24x32xf32, #tpu.memory_space<vmem>>, vector<24x32xf32>,
    return
  }
  func.func @transform_0(%arg0: i32) -> (i32, i32) {
    %c0_i32 = arith.constant 0 : i32
    %c0_i32_0 = arith.constant 0 : i32
    return %arg0, %c0_i32 : i32, i32
  }
  func.func @transform_1(%arg0: i32) -> (i32, i32) {
    %c0_i32 = arith.constant 0 : i32
    %c0_i32_0 = arith.constant 0 : i32
    return %arg0, %c0_i32 : i32, i32
  }
  func.func @transform_2(%arg0: i32) -> (i32, i32) {
    %c0_i32 = arith.constant 0 : i32
    %c0_i32_0 = arith.constant 0 : i32
    %c0_i32_1 = arith.constant 0 : i32
    return %c0_i32, %c0_i32_0 : i32, i32
  }
  func.func @transform_3(%arg0: i32) -> (i32, i32) {
    %c0_i32 = arith.constant 0 : i32
    %c0_i32_0 = arith.constant 0 : i32
    %c0_i32_1 = arith.constant 0 : i32
    return %c0_i32, %c0_i32_0 : i32, i32
  }
  func.func @transform_4(%arg0: i32) -> (i32, i32) {
    %c0_i32 = arith.constant 0 : i32
    %c0_i32_0 = arith.constant 0 : i32
    %c0_i32_1 = arith.constant 0 : i32
    return %c0_i32, %c0_i32_0 : i32, i32
  }
  func.func @transform_5(%arg0: i32) -> (i32, i32) {
    %c0_i32 = arith.constant 0 : i32
    %c0_i32_0 = arith.constant 0 : i32
    %c0_i32_1 = arith.constant 0 : i32
    return %c0_i32, %c0_i32_0 : i32, i32
  }
  func.func @transform_6(%arg0: i32) -> (i32, i32) {
    %c0_i32 = arith.constant 0 : i32
    %c0_i32_0 = arith.constant 0 : i32
    %c0_i32_1 = arith.constant 0 : i32
    return %c0_i32, %c0_i32_0 : i32, i32
  }
  func.func @transform_7(%arg0: i32) -> (i32, i32) {
    %c0_i32 = arith.constant 0 : i32
    %c0_i32_0 = arith.constant 0 : i32
    %c0_i32_1 = arith.constant 0 : i32
    return %c0_i32, %c0_i32_0 : i32, i32
  }
  func.func @transform_8(%arg0: i32) -> (i32, i32) {
    %c0_i32 = arith.constant 0 : i32
    %c0_i32_0 = arith.constant 0 : i32
    return %arg0, %c0_i32 : i32, i32
  }
}

</mosaic_0001>

<llo_original>
// kernel: precond_forward.1
$region0: #{precond_forward.1}
  #allocation0 [shape = 'u32[]', space=smem, size = 0x4, offset = 0x4, fixed_abs, tag = 'smem constant byte address 0x4 - core index']
  #allocation1 [shape = 'u32[144,128]{1,0:T(1,128)}', space=vmem, size = 0x12000, scoped, tag = 'internal scratch']
  %s0 = inlined_call_operand.vmem [shape: f32[48,32], index: 0, kind: input, shape index: {}]
  %s1 = inlined_call_operand.vmem [shape: f32[48,1], index: 1, kind: input, shape index: {}]
  %s2 = inlined_call_operand.vmem [shape: f32[2,16], index: 2, kind: input, shape index: {}]
  %s3 = inlined_call_operand.vmem [shape: f32[32,64], index: 3, kind: input, shape index: {}]
  %s4 = inlined_call_operand.vmem [shape: f32[16,64], index: 4, kind: input, shape index: {}]
  %s5 = inlined_call_operand.vmem [shape: f32[1,64], index: 5, kind: input, shape index: {}]
  %s6 = inlined_call_operand.vmem [shape: f32[64,32], index: 6, kind: input, shape index: {}]
  %s7 = inlined_call_operand.vmem [shape: f32[1,32], index: 7, kind: input, shape index: {}]
  %s8 = inlined_call_operand.vmem [shape: f32[48,32], index: 8, kind: output, shape index: {}]
  %s9 = sld [smem:[#allocation0]]
  $region65: #{precond_forward.1} parent=0
    _
  %s11 = ssub.s32 1, %s9
  %s12 = scalar_select 0, %s11, %s9
  loop: start=0, step=1, limit=4
  $region2: #{precond_forward.1} parent=0 // loop_pre_header
    _
  $region3: #{precond_forward.1} parent=0 // loop_header
    %s14 = sphi 0, %s18
    %p15 = scmp.ge.s32.totalorder %s14, 4
    %s24 = sphi 0, %s26
    %s27 = sphi 0, %s24
    %s28 = sphi 0, %s27
    %s44 = sphi 0, %s28
    %s50 = sphi 0, %s52
    %s53 = sphi 0, %s50
    %s54 = sphi 0, %s53
    %s70 = sphi 0, %s54
    %s74 = sphi 0, %s74
    %s76 = sphi 0, %s74
    %s77 = sphi 0, %s76
    %s91 = sphi 0, %s77
    %s95 = sphi 0, %s95
    %s97 = sphi 0, %s95
    %s98 = sphi 0, %s97
    %s112 = sphi 0, %s98
    %s116 = sphi 0, %s116
    %s118 = sphi 0, %s116
    %s119 = sphi 0, %s118
    %s133 = sphi 0, %s119
    %s137 = sphi 0, %s137
    %s139 = sphi 0, %s137
    %s140 = sphi 0, %s139
    %s154 = sphi 0, %s140
    %s158 = sphi 0, %s158
    %s160 = sphi 0, %s158
    %s161 = sphi 0, %s160
    %s175 = sphi 0, %s161
    %s179 = sphi 0, %s179
    %s181 = sphi 0, %s179
    %s182 = sphi 0, %s181
    %s196 = sphi 0, %s182
    %s202 = sphi 0, %s204
    %s205 = sphi 0, %s202
    %s206 = sphi 0, %s205
    %s222 = sphi 0, %s206
  $region4: #{precond_forward.1} parent=0 // loop_header_branch
    %17 = sbr.rel (%p15) target = $region8
  $region5: #{precond_forward.1} parent=0 // loop_body
    %s19 = ssub.s32 %s14, 1
    %s20 = ssub.s32 %s14, 2
    %s21 = sadd.s32 %s14, 1
    %s22 = ssub.s32 %s14, %s21
    %p23 = scmp.eq.s32.totalorder %s22, 0
    %s25 = sadd.s32 %s24, 1
    %s26 = scalar_select %p23, %s24, %s25
    %p29 = pneg %p23
    %p30 = scmp.eq.s32.totalorder %s14, 1
    %p31 = por %p29, %p30
    %p32 = scmp.ne.s32.totalorder %s24, %s27
    %p33 = scmp.eq.s32.totalorder %s14, 0
    %p34 = por %p32, %p33
    %p35 = scmp.ne.s32.totalorder %s24, %s27
    %p36 = scmp.eq.s32.totalorder %s19, 1
    %p37 = por %p35, %p36
    %p38 = scmp.ne.s32.totalorder %s27, %s28
    %p39 = scmp.eq.s32.totalorder %s19, 0
    %p40 = por %p38, %p39
    %p41 = scmp.ne.s32.totalorder %s27, %s28
    %p42 = scmp.eq.s32.totalorder %s20, 1
    %p43 = por %p41, %p42
    %p45 = scmp.ne.s32.totalorder %s28, %s44
    %p46 = scmp.eq.s32.totalorder %s20, 0
    %p47 = por %p45, %p46
    %s48 = ssub.s32 %s14, %s21
    %p49 = scmp.eq.s32.totalorder %s48, 0
    %s51 = sadd.s32 %s50, 1
    %s52 = scalar_select %p49, %s50, %s51
    %p55 = pneg %p49
    %p56 = scmp.eq.s32.totalorder %s14, 1
    %p57 = por %p55, %p56
    %p58 = scmp.ne.s32.totalorder %s50, %s53
    %p59 = scmp.eq.s32.totalorder %s14, 0
    %p60 = por %p58, %p59
    %p61 = scmp.ne.s32.totalorder %s50, %s53
    %p62 = scmp.eq.s32.totalorder %s19, 1
    %p63 = por %p61, %p62
    %p64 = scmp.ne.s32.totalorder %s53, %s54
    %p65 = scmp.eq.s32.totalorder %s19, 0
    %p66 = por %p64, %p65
    %p67 = scmp.ne.s32.totalorder %s53, %s54
    %p68 = scmp.eq.s32.totalorder %s20, 1
    %p69 = por %p67, %p68
    %p71 = scmp.ne.s32.totalorder %s54, %s70
    %p72 = scmp.eq.s32.totalorder %s20, 0
    %p73 = por %p71, %p72
    %s75 = sadd.s32 %s74, 1
    %p78 = scmp.eq.s32.totalorder %s14, 1
    %p79 = scmp.ne.s32.totalorder %s74, %s76
    %p80 = scmp.eq.s32.totalorder %s14, 0
    %p81 = por %p79, %p80
    %p82 = scmp.ne.s32.totalorder %s74, %s76
    %p83 = scmp.eq.s32.totalorder %s19, 1
    %p84 = por %p82, %p83
    %p85 = scmp.ne.s32.totalorder %s76, %s77
    %p86 = scmp.eq.s32.totalorder %s19, 0
    %p87 = por %p85, %p86
    %p88 = scmp.ne.s32.totalorder %s76, %s77
    %p89 = scmp.eq.s32.totalorder %s20, 1
    %p90 = por %p88, %p89
    %p92 = scmp.ne.s32.totalorder %s77, %s91
    %p93 = scmp.eq.s32.totalorder %s20, 0
    %p94 = por %p92, %p93
    %s96 = sadd.s32 %s95, 1
    %p99 = scmp.eq.s32.totalorder %s14, 1
    %p100 = scmp.ne.s32.totalorder %s95, %s97
    %p101 = scmp.eq.s32.totalorder %s14, 0
    %p102 = por %p100, %p101
    %p103 = scmp.ne.s32.totalorder %s95, %s97
    %p104 = scmp.eq.s32.totalorder %s19, 1
    %p105 = por %p103, %p104
    %p106 = scmp.ne.s32.totalorder %s97, %s98
    %p107 = scmp.eq.s32.totalorder %s19, 0
    %p108 = por %p106, %p107
    %p109 = scmp.ne.s32.totalorder %s97, %s98
    %p110 = scmp.eq.s32.totalorder %s20, 1
    %p111 = por %p109, %p110
    %p113 = scmp.ne.s32.totalorder %s98, %s112
    %p114 = scmp.eq.s32.totalorder %s20, 0
    %p115 = por %p113, %p114
    %s117 = sadd.s32 %s116, 1
    %p120 = scmp.eq.s32.totalorder %s14, 1
    %p121 = scmp.ne.s32.totalorder %s116, %s118
    %p122 = scmp.eq.s32.totalorder %s14, 0
    %p123 = por %p121, %p122
    %p124 = scmp.ne.s32.totalorder %s116, %s118
    %p125 = scmp.eq.s32.totalorder %s19, 1
    %p126 = por %p124, %p125
    %p127 = scmp.ne.s32.totalorder %s118, %s119
    %p128 = scmp.eq.s32.totalorder %s19, 0
    %p129 = por %p127, %p128
    %p130 = scmp.ne.s32.totalorder %s118, %s119
    %p131 = scmp.eq.s32.totalorder %s20, 1
    %p132 = por %p130, %p131
    %p134 = scmp.ne.s32.totalorder %s119, %s133
    %p135 = scmp.eq.s32.totalorder %s20, 0
    %p136 = por %p134, %p135
    %s138 = sadd.s32 %s137, 1
    %p141 = scmp.eq.s32.totalorder %s14, 1
    %p142 = scmp.ne.s32.totalorder %s137, %s139
    %p143 = scmp.eq.s32.totalorder %s14, 0
    %p144 = por %p142, %p143
    %p145 = scmp.ne.s32.totalorder %s137, %s139
    %p146 = scmp.eq.s32.totalorder %s19, 1
    %p147 = por %p145, %p146
    %p148 = scmp.ne.s32.totalorder %s139, %s140
    %p149 = scmp.eq.s32.totalorder %s19, 0
    %p150 = por %p148, %p149
    %p151 = scmp.ne.s32.totalorder %s139, %s140
    %p152 = scmp.eq.s32.totalorder %s20, 1
    %p153 = por %p151, %p152
    %p155 = scmp.ne.s32.totalorder %s140, %s154
    %p156 = scmp.eq.s32.totalorder %s20, 0
    %p157 = por %p155, %p156
    %s159 = sadd.s32 %s158, 1
    %p162 = scmp.eq.s32.totalorder %s14, 1
    %p163 = scmp.ne.s32.totalorder %s158, %s160
    %p164 = scmp.eq.s32.totalorder %s14, 0
    %p165 = por %p163, %p164
    %p166 = scmp.ne.s32.totalorder %s158, %s160
    %p167 = scmp.eq.s32.totalorder %s19, 1
    %p168 = por %p166, %p167
    %p169 = scmp.ne.s32.totalorder %s160, %s161
    %p170 = scmp.eq.s32.totalorder %s19, 0
    %p171 = por %p169, %p170
    %p172 = scmp.ne.s32.totalorder %s160, %s161
    %p173 = scmp.eq.s32.totalorder %s20, 1
    %p174 = por %p172, %p173
    %p176 = scmp.ne.s32.totalorder %s161, %s175
    %p177 = scmp.eq.s32.totalorder %s20, 0
    %p178 = por %p176, %p177
    %s180 = sadd.s32 %s179, 1
    %p183 = scmp.eq.s32.totalorder %s14, 1
    %p184 = scmp.ne.s32.totalorder %s179, %s181
    %p185 = scmp.eq.s32.totalorder %s14, 0
    %p186 = por %p184, %p185
    %p187 = scmp.ne.s32.totalorder %s179, %s181
    %p188 = scmp.eq.s32.totalorder %s19, 1
    %p189 = por %p187, %p188
    %p190 = scmp.ne.s32.totalorder %s181, %s182
    %p191 = scmp.eq.s32.totalorder %s19, 0
    %p192 = por %p190, %p191
    %p193 = scmp.ne.s32.totalorder %s181, %s182
    %p194 = scmp.eq.s32.totalorder %s20, 1
    %p195 = por %p193, %p194
    %p197 = scmp.ne.s32.totalorder %s182, %s196
    %p198 = scmp.eq.s32.totalorder %s20, 0
    %p199 = por %p197, %p198
    %s200 = ssub.s32 %s14, %s21
    %p201 = scmp.eq.s32.totalorder %s200, 0
    %s203 = sadd.s32 %s202, 1
    %s204 = scalar_select %p201, %s202, %s203
    %p207 = pneg %p201
    %p208 = scmp.eq.s32.totalorder %s14, 1
    %p209 = por %p207, %p208
    %p210 = scmp.ne.s32.totalorder %s202, %s205
    %p211 = scmp.eq.s32.totalorder %s14, 0
    %p212 = por %p210, %p211
    %p213 = scmp.ne.s32.totalorder %s202, %s205
    %p214 = scmp.eq.s32.totalorder %s19, 1
    %p215 = por %p213, %p214
    %p216 = scmp.ne.s32.totalorder %s205, %s206
    %p217 = scmp.eq.s32.totalorder %s19, 0
    %p218 = por %p216, %p217
    %p219 = scmp.ne.s32.totalorder %s205, %s206
    %p220 = scmp.eq.s32.totalorder %s20, 1
    %p221 = por %p219, %p220
    %p223 = scmp.ne.s32.totalorder %s206, %s222
    %p224 = scmp.eq.s32.totalorder %s20, 0
    %p225 = por %p223, %p224
    %p226 = scmp.le.s32.totalorder 1, %s14
    %p227 = scmp.lt.s32.totalorder %s14, 3
    %p228 = pnand %p226, %p227
    %p229 = pneg %p228
    // Predicated region
    $region9: #{precond_forward.1} parent=5 // pred_check
      _
    $region10: #{precond_forward.1} parent=5 // pred_check_branch
      %231 = sbr.rel (%p228) target = $region12
    $region11: #{precond_forward.1} parent=5 // pred_region
      %s232 = ssub.s32 %s14, 1
      // Predicated region
      $region13: #{precond_forward.1} parent=11 // pred_check
        %p233 = pneg %p87
      $region14: #{precond_forward.1} parent=11 // pred_check_branch
        %235 = sbr.rel (%p233) target = $region16
      $region15: #{precond_forward.1} parent=11 // pred_region
        _
      $region16: #{precond_forward.1} parent=11 // pred_fallthru
        _
      // Predicated region
      $region17: #{precond_forward.1} parent=11 // pred_check
        %p236 = pneg %p108
      $region18: #{precond_forward.1} parent=11 // pred_check_branch
        %238 = sbr.rel (%p236) target = $region20
      $region19: #{precond_forward.1} parent=11 // pred_region
        _
      $region20: #{precond_forward.1} parent=11 // pred_fallthru
        _
      // Predicated region
      $region21: #{precond_forward.1} parent=11 // pred_check
        %p239 = pneg %p129
      $region22: #{precond_forward.1} parent=11 // pred_check_branch
        %241 = sbr.rel (%p239) target = $region24
      $region23: #{precond_forward.1} parent=11 // pred_region
        _
      $region24: #{precond_forward.1} parent=11 // pred_fallthru
        _
      // Predicated region
      $region25: #{precond_forward.1} parent=11 // pred_check
        %p242 = pneg %p150
      $region26: #{precond_forward.1} parent=11 // pred_check_branch
        %244 = sbr.rel (%p242) target = $region28
      $region27: #{precond_forward.1} parent=11 // pred_region
        _
      $region28: #{precond_forward.1} parent=11 // pred_fallthru
        _
      // Predicated region
      $region29: #{precond_forward.1} parent=11 // pred_check
        %p245 = pneg %p171
      $region30: #{precond_forward.1} parent=11 // pred_check_branch
        %247 = sbr.rel (%p245) target = $region32
      $region31: #{precond_forward.1} parent=11 // pred_region
        _
      $region32: #{precond_forward.1} parent=11 // pred_fallthru
        _
      // Predicated region
      $region33: #{precond_forward.1} parent=11 // pred_check
        %p248 = pneg %p192
      $region34: #{precond_forward.1} parent=11 // pred_check_branch
        %250 = sbr.rel (%p248) target = $region36
      $region35: #{precond_forward.1} parent=11 // pred_region
        _
      $region36: #{precond_forward.1} parent=11 // pred_fallthru
        _
    $region12: #{precond_forward.1} parent=5 // pred_fallthru
      _
    %p251 = scmp.lt.s32.totalorder %s14, 2
    // Predicated region
    $region37: #{precond_forward.1} parent=5 // pred_check
      %p252 = pneg %p251
    $region38: #{precond_forward.1} parent=5 // pred_check_branch
      %254 = sbr.rel (%p252) target = $region40
    $region39: #{precond_forward.1} parent=5 // pred_region
      // Predicated region
      $region41: #{precond_forward.1} parent=39 // pred_check
        %p255 = pneg %p34
      $region42: #{precond_forward.1} parent=39 // pred_check_branch
        %257 = sbr.rel (%p255) target = $region44
      $region43: #{precond_forward.1} parent=39 // pred_region
        %s258 = smul.u32 3, %s14
        %p259 = scmp.lt.s32.totalorder %s258, 5
        %s260 = scalar_select %p259, %s258, 5
        %s261 = smul.addr %s260, 8
        %s262 = scalar_lea.vmem %s0, %s261
        %s263 = smul.u32 3, %s14
      $region44: #{precond_forward.1} parent=39 // pred_fallthru
        _
      // Predicated region
      $region45: #{precond_forward.1} parent=39 // pred_check
        %p264 = pneg %p60
      $region46: #{precond_forward.1} parent=39 // pred_check_branch
        %266 = sbr.rel (%p264) target = $region48
      $region47: #{precond_forward.1} parent=39 // pred_region
        %s267 = smul.u32 3, %s14
        %p268 = scmp.lt.s32.totalorder %s267, 5
        %s269 = scalar_select %p268, %s267, 5
        %s270 = smul.addr %s269, 8
        %s271 = scalar_lea.vmem %s1, %s270
        %s272 = smul.u32 3, %s14
      $region48: #{precond_forward.1} parent=39 // pred_fallthru
        _
    $region40: #{precond_forward.1} parent=5 // pred_fallthru
      _
    %p273 = scmp.le.s32.totalorder 1, %s14
    %p274 = scmp.lt.s32.totalorder %s14, 3
    %p275 = pnand %p273, %p274
    %p276 = pneg %p275
    // Predicated region
    $region49: #{precond_forward.1} parent=5 // pred_check
      _
    $region50: #{precond_forward.1} parent=5 // pred_check_branch
      %278 = sbr.rel (%p275) target = $region52
    $region51: #{precond_forward.1} parent=5 // pred_region
      %s279 = ssub.s32 %s14, 1
      %s280 = smul.u32 3, %s19
      %p281 = scmp.lt.s32.totalorder %s280, 5
      %s282 = scalar_select %p281, %s280, 5
      %s283 = smul.addr %s282, 8
      %s284 = scalar_lea.vmem %s0, %s283
      %p285 = pneg %p40
      %p286 = pneg %p37
      %s287 = smul.u32 3, %s19
      %p288 = scmp.lt.s32.totalorder %s287, 5
      %s289 = scalar_select %p288, %s287, 5
      %s290 = smul.addr %s289, 8
      %s291 = scalar_lea.vmem %s1, %s290
      %p292 = pneg %p66
      %p293 = pneg %p63
      %p294 = pneg %p87
      %p295 = pneg %p84
      %p296 = pneg %p108
      %p297 = pneg %p105
      %p298 = pneg %p129
      %p299 = pneg %p126
      %p300 = pneg %p150
      %p301 = pneg %p147
      %p302 = pneg %p171
      %p303 = pneg %p168
      %p304 = pneg %p192
      %p305 = pneg %p189
      %p306 = pneg %p218
      %p307 = pneg %p215
      %s308 = smul.u32 3, %s19
      %p309 = scmp.lt.s32.totalorder %s308, 5
      %s310 = scalar_select %p309, %s308, 5
      %s311 = smul.addr %s310, 8
      %s312 = scalar_lea.vmem %s8, %s311
      %s313 = smul.u32 3, %s19
      %p314 = scmp.lt.s32.totalorder %s313, 5
      %s315 = scalar_select %p314, %s313, 5
      %s316 = smul.addr %s315, 8
      %s317 = scalar_lea.vmem %s0, %s316
      %s318 = smul.u32 3, %s19
      %s319 = smul.u32 3, %s19
      %p320 = scmp.lt.s32.totalorder %s319, 5
      %s321 = scalar_select %p320, %s319, 5
      %s322 = smul.addr %s321, 8
      %s323 = scalar_lea.vmem %s1, %s322
      %s324 = smul.u32 3, %s19
      %s325 = smul.u32 3, %s19
      %p326 = scmp.lt.s32.totalorder %s325, 5
      %s327 = scalar_select %p326, %s325, 5
      %s328 = smul.addr %s327, 8
      %s329 = scalar_lea.vmem %s8, %s328
      %s330 = smul.u32 3, %s19
      %v331 = vld [vmem:[%s317] sm:$0xff]
      %v332 = vld [vmem:[%s317 + $0x8] sm:$0xff]
      %v333 = vld [vmem:[%s317 + $0x10] sm:$0xff]
      %v334 = vld [vmem:[%s323] sm:$0xff]
      %v335 = vld [vmem:[%s323 + $0x8] sm:$0xff]
      %v336 = vld [vmem:[%s323 + $0x10] sm:$0xff]
      %v337 = vmul.f32 %v334, %v334
      %v338 = vmul.f32 %v335, %v335
      %v339 = vmul.f32 %v336, %v336
      %v340 = vadd.f32 %v337, 0.25
      %v341 = vadd.f32 %v338, 0.25
      %v342 = vadd.f32 %v339, 0.25
      %v343 = vrsqrt.pop %v340
      %v344 = vrsqrt.pop %v341
      %v345 = vrsqrt.pop %v342
      %v346 = vmul.f32 %v334, 0.5
      %v347 = vmul.f32 %v335, 0.5
      %v348 = vmul.f32 %v336, 0.5
      %v349 = vmul.f32 %v346, %v343
      %v350 = vmul.f32 %v347, %v344
      %v351 = vmul.f32 %v348, %v345
      %v352 = vmul.f32 %v343, %v343
      %v353 = vmul.f32 %v344, %v344
      %v354 = vmul.f32 %v345, %v345
      %v355 = vmul.f32 %v352, 0.25
      %v356 = vmul.f32 %v353, 0.25
      %v357 = vmul.f32 %v354, 0.25
      %v358 = vlog2.pop %v334
      %v359 = vmul.f32 %v358, 0.6931472
      %v360 = vlog2.pop %v335
      %v361 = vmul.f32 %v360, 0.6931472
      %v362 = vlog2.pop %v336
      %v363 = vmul.f32 %v362, 0.6931472
      %v364 = vmul.f32 %v359, 0.25
      %v365 = vmul.f32 %v361, 0.25
      %v366 = vmul.f32 %v363, 0.25
      %v367 = vld [vmem:[%s2] sm:$0x3]
      %369 = vset.pattern.permute.xlu0 0
      %370 = vperm.xlu0 %369, %v364
      %v371 = vpop.permute.xlu0 %370
      %374 = vset.pattern.permute.xlu0 0
      %375 = vperm.xlu0 %374, %v365
      %v376 = vpop.permute.xlu0 %375
      %379 = vset.pattern.permute.xlu0 0
      %380 = vperm.xlu0 %379, %v366
      %v381 = vpop.permute.xlu0 %380
      %v383 = vlaneseq
      %v384 = vshrl.u32 %v383, 7
      %v385 = vsub.s32 0, %v384
      %v386 = vrot.slane %v367, %v385
      %v387 = vmul.f32 %v371, %v386
      %v388 = vmul.f32 %v376, %v386
      %v389 = vmul.f32 %v381, %v386
      %v390 = vlaneseq
      %v391 = vshrl.u32 %v390, 7
      %v392 = vsub.s32 1, %v391
      %v393 = vrot.slane %v367, %v392
      %v394 = vadd.f32 %v387, %v393
      %v395 = vadd.f32 %v388, %v393
      %v396 = vadd.f32 %v389, %v393
      %v397 = vand.u32 2147483647, %v394
      %vm398 = vcmp.le.f32.partialorder %v397, 0.7853982
      %vm399 = vcmp.lt.s32.totalorder %v394, 0
      %v400 = vand.u32 %v394, 2139095040
      %v401 = vshrl.u32 %v400, 23
      %v402 = vsub.s32 %v401, 127
      %v403 = vand.u32 2147483647, %v394
      %v404 = vand.u32 %v403, 8388607
      %v405 = vor.u32 %v404, 8388608
      %v406 = vsub.s32 0, %v405
      %v407 = vadd.s32 %v402, 1
      %vm408 = vcmp.gt.s32.totalorder %v407, 0
      %v409 = vsel %vm408, %v407, 0
      %v410 = vshrl.u32 %v409, 5
      %v411 = vand.u32 %v409, 31
      %v412 = vsub.s32 32, %v411
      %v413 = vshrl.u32 683565275, %v412
      %v414 = vshll.u32 683565275, %v411
      %v415 = vshrl.u32 2475754826, %v412
      %v416 = vor.u32 %v414, %v415
      %v417 = vshll.u32 2475754826, %v411
      %v418 = vshrl.u32 2131351028, %v412
      %v419 = vor.u32 %v417, %v418
      %v420 = vshll.u32 2131351028, %v411
      %v421 = vshrl.u32 2102212464, %v412
      %v422 = vor.u32 %v420, %v421
      %v423 = vshll.u32 2102212464, %v411
      %v424 = vshrl.u32 920167782, %v412
      %v425 = vor.u32 %v423, %v424
      %v426 = vshll.u32 920167782, %v411
      %v427 = vshrl.u32 1326507024, %v412
      %v428 = vor.u32 %v426, %v427
      %vm429 = vcmp.lt.s32.totalorder %v410, 1
      %vm430 = vcmp.lt.s32.totalorder %v410, 2
      %vm431 = vcmp.lt.s32.totalorder %v410, 3
      %vm432 = vcmp.lt.s32.totalorder %v410, 4
      %v433 = vsel %vm429, %v413, %v416
      %v434 = vsel %vm432, %v422, 2102212464
      %v435 = vsel %vm431, %v419, %v434
      %v436 = vsel %vm430, %v433, %v435
      %v437 = vsel %vm429, %v416, %v419
      %v438 = vsel %vm432, %v425, 920167782
      %v439 = vsel %vm431, %v422, %v438
      %v440 = vsel %vm430, %v437, %v439
      %v441 = vsel %vm429, %v419, %v422
      %v442 = vsel %vm432, %v428, 1326507024
      %v443 = vsel %vm431, %v425, %v442
      %v444 = vsel %vm430, %v441, %v443
      %v445 = vshll.u32 %v405, 8
      %v446 = vmul.u32.u64.compose %v445, %v444
      %v447 = vextract.low.u32 %v446
      %v448 = vextract.high.u32 %v446
      %v449 = vmul.u32.u64.compose %v445, %v440
      %v450 = vextract.low.u32 %v449
      %v451 = vextract.high.u32 %v449
      %v452 = vmul.u32 %v445, %v436
      %v453 = vadd.s32 %v448, %v450
      %vm454 = vc.u32 %v448, %v450
      %v455 = vadd.s32 %v451, 1
      %v456 = vsel %vm454, %v455, %v451
      %v457 = vadd.s32 %v452, %v456
      %v458 = vadd.s32 %v457, 536870912
      %v459 = vshrl.u32 %v458, 30
      %v460 = vshll.u32 %v459, 30
      %v461 = vsub.s32 %v457, %v460
      %vm462 = vcmp.lt.s32.totalorder %v461, 0
      %v463 = vsub.s32 0, %v461
      %v464 = vsel %vm462, %v463, %v461
      %v465 = vclz %v464
      %v466 = vsub.s32 %v465, 2
      %vm467 = vcmp.gt.s32.totalorder 0, %v466
      %v468 = vsel %vm467, 0, %v466
      %v469 = vsub.s32 32, %v468
      %v470 = vshll.u32 %v461, %v468
      %v471 = vshrl.u32 %v453, %v469
      %v472 = vor.u32 %v470, %v471
      %v473 = vsub.s32 4294967266, %v468
      %v474 = vadd.s32 %v473, 127
      %v475 = vshll.u32 %v474, 23
      %v476 = vor.u32 4788187, %v475
      %v477 = vand.u32 2147483647, %v476
      %v479 = vcvt.s32.f32 %v472
      %v480 = vmul.f32 %v479, %v477
      %v481 = vxor.u32 %v480, 2147483648
      %v482 = vsel %vm399, %v481, %v480
      %v483 = vsub.s32 4, %v459
      %v484 = vsel %vm399, %v483, %v459
      %v485 = vsel %vm398, %v394, %v482
      %v486 = vsel %vm398, 0, %v484
      %v487 = vcosq.f32.pop %v485
      %v488 = vsinq.f32.pop %v485
      %vm489 = vweird.f32 %v394
      %v490 = vadd.s32 %v486, 3
      %v491 = vand.u32 %v490, 3
      %vm492 = vcmp.lt.s32.totalorder %v491, 2
      %vm493 = vcmp.eq.s32.totalorder %v491, 0
      %v494 = vxor.u32 %v488, 2147483648
      %v495 = vsel %vm493, %v487, %v494
      %vm496 = vcmp.eq.s32.totalorder %v491, 2
      %v497 = vxor.u32 %v487, 2147483648
      %v498 = vsel %vm496, %v497, %v488
      %v499 = vsel %vm492, %v495, %v498
      %v500 = vsel %vm489, nan, %v499
      %v501 = vand.u32 2147483647, %v395
      %vm502 = vcmp.le.f32.partialorder %v501, 0.7853982
      %vm503 = vcmp.lt.s32.totalorder %v395, 0
      %v504 = vand.u32 %v395, 2139095040
      %v505 = vshrl.u32 %v504, 23
      %v506 = vsub.s32 %v505, 127
      %v507 = vand.u32 2147483647, %v395
      %v508 = vand.u32 %v507, 8388607
      %v509 = vor.u32 %v508, 8388608
      %v510 = vsub.s32 0, %v509
      %v511 = vadd.s32 %v506, 1
      %vm512 = vcmp.gt.s32.totalorder %v511, 0
      %v513 = vsel %vm512, %v511, 0
      %v514 = vshrl.u32 %v513, 5
      %v515 = vand.u32 %v513, 31
      %v516 = vsub.s32 32, %v515
      %v517 = vshrl.u32 683565275, %v516
      %v518 = vshll.u32 683565275, %v515
      %v519 = vshrl.u32 2475754826, %v516
      %v520 = vor.u32 %v518, %v519
      %v521 = vshll.u32 2475754826, %v515
      %v522 = vshrl.u32 2131351028, %v516
      %v523 = vor.u32 %v521, %v522
      %v524 = vshll.u32 2131351028, %v515
      %v525 = vshrl.u32 2102212464, %v516
      %v526 = vor.u32 %v524, %v525
      %v527 = vshll.u32 2102212464, %v515
      %v528 = vshrl.u32 920167782, %v516
      %v529 = vor.u32 %v527, %v528
      %v530 = vshll.u32 920167782, %v515
      %v531 = vshrl.u32 1326507024, %v516
      %v532 = vor.u32 %v530, %v531
      %vm533 = vcmp.lt.s32.totalorder %v514, 1
      %vm534 = vcmp.lt.s32.totalorder %v514, 2
      %vm535 = vcmp.lt.s32.totalorder %v514, 3
      %vm536 = vcmp.lt.s32.totalorder %v514, 4
      %v537 = vsel %vm533, %v517, %v520
      %v538 = vsel %vm536, %v526, 2102212464
      %v539 = vsel %vm535, %v523, %v538
      %v540 = vsel %vm534, %v537, %v539
      %v541 = vsel %vm533, %v520, %v523
      %v542 = vsel %vm536, %v529, 920167782
      %v543 = vsel %vm535, %v526, %v542
      %v544 = vsel %vm534, %v541, %v543
      %v545 = vsel %vm533, %v523, %v526
      %v546 = vsel %vm536, %v532, 1326507024
      %v547 = vsel %vm535, %v529, %v546
      %v548 = vsel %vm534, %v545, %v547
      %v549 = vshll.u32 %v509, 8
      %v550 = vmul.u32.u64.compose %v549, %v548
      %v551 = vextract.low.u32 %v550
      %v552 = vextract.high.u32 %v550
      %v553 = vmul.u32.u64.compose %v549, %v544
      %v554 = vextract.low.u32 %v553
      %v555 = vextract.high.u32 %v553
      %v556 = vmul.u32 %v549, %v540
      %v557 = vadd.s32 %v552, %v554
      %vm558 = vc.u32 %v552, %v554
      %v559 = vadd.s32 %v555, 1
      %v560 = vsel %vm558, %v559, %v555
      %v561 = vadd.s32 %v556, %v560
      %v562 = vadd.s32 %v561, 536870912
      %v563 = vshrl.u32 %v562, 30
      %v564 = vshll.u32 %v563, 30
      %v565 = vsub.s32 %v561, %v564
      %vm566 = vcmp.lt.s32.totalorder %v565, 0
      %v567 = vsub.s32 0, %v565
      %v568 = vsel %vm566, %v567, %v565
      %v569 = vclz %v568
      %v570 = vsub.s32 %v569, 2
      %vm571 = vcmp.gt.s32.totalorder 0, %v570
      %v572 = vsel %vm571, 0, %v570
      %v573 = vsub.s32 32, %v572
      %v574 = vshll.u32 %v565, %v572
      %v575 = vshrl.u32 %v557, %v573
      %v576 = vor.u32 %v574, %v575
      %v577 = vsub.s32 4294967266, %v572
      %v578 = vadd.s32 %v577, 127
      %v579 = vshll.u32 %v578, 23
      %v580 = vor.u32 4788187, %v579
      %v581 = vand.u32 2147483647, %v580
      %v583 = vcvt.s32.f32 %v576
      %v584 = vmul.f32 %v583, %v581
      %v585 = vxor.u32 %v584, 2147483648
      %v586 = vsel %vm503, %v585, %v584
      %v587 = vsub.s32 4, %v563
      %v588 = vsel %vm503, %v587, %v563
      %v589 = vsel %vm502, %v395, %v586
      %v590 = vsel %vm502, 0, %v588
      %v591 = vcosq.f32.pop %v589
      %v592 = vsinq.f32.pop %v589
      %vm593 = vweird.f32 %v395
      %v594 = vadd.s32 %v590, 3
      %v595 = vand.u32 %v594, 3
      %vm596 = vcmp.lt.s32.totalorder %v595, 2
      %vm597 = vcmp.eq.s32.totalorder %v595, 0
      %v598 = vxor.u32 %v592, 2147483648
      %v599 = vsel %vm597, %v591, %v598
      %vm600 = vcmp.eq.s32.totalorder %v595, 2
      %v601 = vxor.u32 %v591, 2147483648
      %v602 = vsel %vm600, %v601, %v592
      %v603 = vsel %vm596, %v599, %v602
      %v604 = vsel %vm593, nan, %v603
      %v605 = vand.u32 2147483647, %v396
      %vm606 = vcmp.le.f32.partialorder %v605, 0.7853982
      %vm607 = vcmp.lt.s32.totalorder %v396, 0
      %v608 = vand.u32 %v396, 2139095040
      %v609 = vshrl.u32 %v608, 23
      %v610 = vsub.s32 %v609, 127
      %v611 = vand.u32 2147483647, %v396
      %v612 = vand.u32 %v611, 8388607
      %v613 = vor.u32 %v612, 8388608
      %v614 = vsub.s32 0, %v613
      %v615 = vadd.s32 %v610, 1
      %vm616 = vcmp.gt.s32.totalorder %v615, 0
      %v617 = vsel %vm616, %v615, 0
      %v618 = vshrl.u32 %v617, 5
      %v619 = vand.u32 %v617, 31
      %v620 = vsub.s32 32, %v619
      %v621 = vshrl.u32 683565275, %v620
      %v622 = vshll.u32 683565275, %v619
      %v623 = vshrl.u32 2475754826, %v620
      %v624 = vor.u32 %v622, %v623
      %v625 = vshll.u32 2475754826, %v619
      %v626 = vshrl.u32 2131351028, %v620
      %v627 = vor.u32 %v625, %v626
      %v628 = vshll.u32 2131351028, %v619
      %v629 = vshrl.u32 2102212464, %v620
      %v630 = vor.u32 %v628, %v629
      %v631 = vshll.u32 2102212464, %v619
      %v632 = vshrl.u32 920167782, %v620
      %v633 = vor.u32 %v631, %v632
      %v634 = vshll.u32 920167782, %v619
      %v635 = vshrl.u32 1326507024, %v620
      %v636 = vor.u32 %v634, %v635
      %vm637 = vcmp.lt.s32.totalorder %v618, 1
      %vm638 = vcmp.lt.s32.totalorder %v618, 2
      %vm639 = vcmp.lt.s32.totalorder %v618, 3
      %vm640 = vcmp.lt.s32.totalorder %v618, 4
      %v641 = vsel %vm637, %v621, %v624
      %v642 = vsel %vm640, %v630, 2102212464
      %v643 = vsel %vm639, %v627, %v642
      %v644 = vsel %vm638, %v641, %v643
      %v645 = vsel %vm637, %v624, %v627
      %v646 = vsel %vm640, %v633, 920167782
      %v647 = vsel %vm639, %v630, %v646
      %v648 = vsel %vm638, %v645, %v647
      %v649 = vsel %vm637, %v627, %v630
      %v650 = vsel %vm640, %v636, 1326507024
      %v651 = vsel %vm639, %v633, %v650
      %v652 = vsel %vm638, %v649, %v651
      %v653 = vshll.u32 %v613, 8
      %v654 = vmul.u32.u64.compose %v653, %v652
      %v655 = vextract.low.u32 %v654
      %v656 = vextract.high.u32 %v654
      %v657 = vmul.u32.u64.compose %v653, %v648
      %v658 = vextract.low.u32 %v657
      %v659 = vextract.high.u32 %v657
      %v660 = vmul.u32 %v653, %v644
      %v661 = vadd.s32 %v656, %v658
      %vm662 = vc.u32 %v656, %v658
      %v663 = vadd.s32 %v659, 1
      %v664 = vsel %vm662, %v663, %v659
      %v665 = vadd.s32 %v660, %v664
      %v666 = vadd.s32 %v665, 536870912
      %v667 = vshrl.u32 %v666, 30
      %v668 = vshll.u32 %v667, 30
      %v669 = vsub.s32 %v665, %v668
      %vm670 = vcmp.lt.s32.totalorder %v669, 0
      %v671 = vsub.s32 0, %v669
      %v672 = vsel %vm670, %v671, %v669
      %v673 = vclz %v672
      %v674 = vsub.s32 %v673, 2
      %vm675 = vcmp.gt.s32.totalorder 0, %v674
      %v676 = vsel %vm675, 0, %v674
      %v677 = vsub.s32 32, %v676
      %v678 = vshll.u32 %v669, %v676
      %v679 = vshrl.u32 %v661, %v677
      %v680 = vor.u32 %v678, %v679
      %v681 = vsub.s32 4294967266, %v676
      %v682 = vadd.s32 %v681, 127
      %v683 = vshll.u32 %v682, 23
      %v684 = vor.u32 4788187, %v683
      %v685 = vand.u32 2147483647, %v684
      %v687 = vcvt.s32.f32 %v680
      %v688 = vmul.f32 %v687, %v685
      %v689 = vxor.u32 %v688, 2147483648
      %v690 = vsel %vm607, %v689, %v688
      %v691 = vsub.s32 4, %v667
      %v692 = vsel %vm607, %v691, %v667
      %v693 = vsel %vm606, %v396, %v690
      %v694 = vsel %vm606, 0, %v692
      %v695 = vcosq.f32.pop %v693
      %v696 = vsinq.f32.pop %v693
      %vm697 = vweird.f32 %v396
      %v698 = vadd.s32 %v694, 3
      %v699 = vand.u32 %v698, 3
      %vm700 = vcmp.lt.s32.totalorder %v699, 2
      %vm701 = vcmp.eq.s32.totalorder %v699, 0
      %v702 = vxor.u32 %v696, 2147483648
      %v703 = vsel %vm701, %v695, %v702
      %vm704 = vcmp.eq.s32.totalorder %v699, 2
      %v705 = vxor.u32 %v695, 2147483648
      %v706 = vsel %vm704, %v705, %v696
      %v707 = vsel %vm700, %v703, %v706
      %v708 = vsel %vm697, nan, %v707
      %710 = vset.pattern.permute.xlu0 0
      %711 = vperm.xlu0 %710, %v343
      %v712 = vpop.permute.xlu0 %711
      %715 = vset.pattern.permute.xlu0 0
      %716 = vperm.xlu0 %715, %v344
      %v717 = vpop.permute.xlu0 %716
      %720 = vset.pattern.permute.xlu0 0
      %721 = vperm.xlu0 %720, %v345
      %v722 = vpop.permute.xlu0 %721
      %v724 = vmul.f32 %v712, %v331
      %v725 = vmul.f32 %v717, %v332
      %v726 = vmul.f32 %v722, %v333
      %v727 = vld [vmem:[%s3] sm:$0xff]
      %v728 = vld [vmem:[%s3 + $0x8] sm:$0xff]
      %v729 = vld [vmem:[%s3 + $0x10] sm:$0xff]
      %v730 = vld [vmem:[%s3 + $0x18] sm:$0xff]
      %v731 = vld [vmem:[%s4] sm:$0xff]
      %v732 = vld [vmem:[%s4 + $0x8] sm:$0xff]
      %vm733 = vcmask 130048
      %v735 = vsel %vm733, %v500, 0
      %v738 = vsel %vm733, %v604, 0
      %v741 = vsel %vm733, %v708, 0
      %743 = vmatprep.subr.mxu0 0.0
      %744 = vmatpush1.msra.mxu0 %v731
      %745 = vmatprep.subr.mxu0 0.0
      %746 = vmatpush1.msra.mxu0 %v732
      %747 = vmatprep.subr.mxu0 0.0
      %748 = vmatpush1.msra.mxu0 0.0
      %749 = vmatprep.subr.mxu0 0.0
      %750 = vmatpush1.msra.mxu0 0.0
      %751 = vmatprep.subr.mxu0 0.0
      %752 = vmatpush1.msra.mxu0 0.0
      %753 = vmatprep.subr.mxu0 0.0
      %754 = vmatpush1.msra.mxu0 0.0
      %755 = vmatprep.subr.mxu0 0.0
      %756 = vmatpush1.msra.mxu0 0.0
      %757 = vmatprep.subr.mxu0 0.0
      %758 = vmatpush1.msra.mxu0 0.0
      %759 = vmatprep.subr.mxu0 0.0
      %760 = vmatpush1.msra.mxu0 0.0
      %761 = vmatprep.subr.mxu0 0.0
      %762 = vmatpush1.msra.mxu0 0.0
      %763 = vmatprep.subr.mxu0 0.0
      %764 = vmatpush1.msra.mxu0 0.0
      %765 = vmatprep.subr.mxu0 0.0
      %766 = vmatpush1.msra.mxu0 0.0
      %767 = vmatprep.subr.mxu0 0.0
      %768 = vmatpush1.msra.mxu0 0.0
      %769 = vmatprep.subr.mxu0 0.0
      %770 = vmatpush1.msra.mxu0 0.0
      %771 = vmatprep.subr.mxu0 0.0
      %772 = vmatpush1.msra.mxu0 0.0
      %773 = vmatprep.subr.mxu0 0.0
      %774 = vmatpush1.msra.mxu0 0.0
      %775 = vmatprep.subr.mxu0 0.0
      %776 = vmatpush1.msra.mxu0 0.0
      %777 = vmatprep.subr.mxu0 0.0
      %778 = vmatpush1.msra.mxu0 0.0
      %779 = vmatprep.subr.mxu0 0.0
      %780 = vmatpush1.msra.mxu0 0.0
      %781 = vmatprep.subr.mxu0 0.0
      %782 = vmatpush1.msra.mxu0 0.0
      %783 = vmatprep.subr.mxu0 0.0
      %784 = vmatpush1.msra.mxu0 0.0
      %785 = vmatprep.subr.mxu0 0.0
      %786 = vmatpush1.msra.mxu0 0.0
      %787 = vmatprep.subr.mxu0 0.0
      %788 = vmatpush1.msra.mxu0 0.0
      %789 = vmatprep.subr.mxu0 0.0
      %790 = vmatpush1.msra.mxu0 0.0
      %791 = vmatprep.subr.mxu0 0.0
      %792 = vmatpush1.msra.mxu0 0.0
      %793 = vmatprep.subr.mxu0 0.0
      %794 = vmatpush1.msra.mxu0 0.0
      %795 = vmatprep.subr.mxu0 0.0
      %796 = vmatpush1.msra.mxu0 0.0
      %797 = vmatprep.subr.mxu0 0.0
      %798 = vmatpush1.msra.mxu0 0.0
      %799 = vmatprep.subr.mxu0 0.0
      %800 = vmatpush1.msra.mxu0 0.0
      %801 = vmatprep.subr.mxu0 0.0
      %802 = vmatpush1.msra.mxu0 0.0
      %803 = vmatprep.subr.mxu0 0.0
      %804 = vmatpush1.msra.mxu0 0.0
      %805 = vmatprep.subr.mxu0 0.0
      %806 = vmatpush1.msra.mxu0 0.0
      %807 = vmatprep.mubr.f32.mxu0 0.0
      %808 = vmatmul.mubr.f32.gmra.mrb[0].mxu0 %v735
      %v809 = vpop.f32.mrb[0].mxu0
      %v810 = vadd.f32 0.0, %v809
      %v811 = vpop.f32.mrb[0].mxu0
      %812 = vmatprep.mubr.f32.mxu0 0.0
      %813 = vmatmul.mubr.f32.gmra.mrb[0].mxu0 %v738
      %v814 = vpop.f32.mrb[0].mxu0
      %v815 = vadd.f32 0.0, %v814
      %v816 = vpop.f32.mrb[0].mxu0
      %817 = vmatprep.mubr.f32.mxu0 0.0
      %818 = vmatmul.mubr.f32.gmra.mrb[0].mxu0 %v741
      %v819 = vpop.f32.mrb[0].mxu0
      %v820 = vadd.f32 0.0, %v819
      %v821 = vpop.f32.mrb[0].mxu0
      %822 = vdwg.mxu0
      %vm823 = vcmask 261120
      %v825 = vsel %vm823, %v724, 0
      %v828 = vsel %vm823, %v725, 0
      %v831 = vsel %vm823, %v726, 0
      %833 = vmatprep.subr.mxu0 0.0
      %834 = vmatpush1.msra.mxu0 %v727
      %835 = vmatprep.subr.mxu0 0.0
      %836 = vmatpush1.msra.mxu0 %v728
      %837 = vmatprep.subr.mxu0 0.0
      %838 = vmatpush1.msra.mxu0 %v729
      %839 = vmatprep.subr.mxu0 0.0
      %840 = vmatpush1.msra.mxu0 %v730
      %841 = vmatprep.subr.mxu0 0.0
      %842 = vmatpush1.msra.mxu0 0.0
      %843 = vmatprep.subr.mxu0 0.0
      %844 = vmatpush1.msra.mxu0 0.0
      %845 = vmatprep.subr.mxu0 0.0
      %846 = vmatpush1.msra.mxu0 0.0
      %847 = vmatprep.subr.mxu0 0.0
      %848 = vmatpush1.msra.mxu0 0.0
      %849 = vmatprep.subr.mxu0 0.0
      %850 = vmatpush1.msra.mxu0 0.0
      %851 = vmatprep.subr.mxu0 0.0
      %852 = vmatpush1.msra.mxu0 0.0
      %853 = vmatprep.subr.mxu0 0.0
      %854 = vmatpush1.msra.mxu0 0.0
      %855 = vmatprep.subr.mxu0 0.0
      %856 = vmatpush1.msra.mxu0 0.0
      %857 = vmatprep.subr.mxu0 0.0
      %858 = vmatpush1.msra.mxu0 0.0
      %859 = vmatprep.subr.mxu0 0.0
      %860 = vmatpush1.msra.mxu0 0.0
      %861 = vmatprep.subr.mxu0 0.0
      %862 = vmatpush1.msra.mxu0 0.0
      %863 = vmatprep.subr.mxu0 0.0
      %864 = vmatpush1.msra.mxu0 0.0
      %865 = vmatprep.subr.mxu0 0.0
      %866 = vmatpush1.msra.mxu0 0.0
      %867 = vmatprep.subr.mxu0 0.0
      %868 = vmatpush1.msra.mxu0 0.0
      %869 = vmatprep.subr.mxu0 0.0
      %870 = vmatpush1.msra.mxu0 0.0
      %871 = vmatprep.subr.mxu0 0.0
      %872 = vmatpush1.msra.mxu0 0.0
      %873 = vmatprep.subr.mxu0 0.0
      %874 = vmatpush1.msra.mxu0 0.0
      %875 = vmatprep.subr.mxu0 0.0
      %876 = vmatpush1.msra.mxu0 0.0
      %877 = vmatprep.subr.mxu0 0.0
      %878 = vmatpush1.msra.mxu0 0.0
      %879 = vmatprep.subr.mxu0 0.0
      %880 = vmatpush1.msra.mxu0 0.0
      %881 = vmatprep.subr.mxu0 0.0
      %882 = vmatpush1.msra.mxu0 0.0
      %883 = vmatprep.subr.mxu0 0.0
      %884 = vmatpush1.msra.mxu0 0.0
      %885 = vmatprep.subr.mxu0 0.0
      %886 = vmatpush1.msra.mxu0 0.0
      %887 = vmatprep.subr.mxu0 0.0
      %888 = vmatpush1.msra.mxu0 0.0
      %889 = vmatprep.subr.mxu0 0.0
      %890 = vmatpush1.msra.mxu0 0.0
      %891 = vmatprep.subr.mxu0 0.0
      %892 = vmatpush1.msra.mxu0 0.0
      %893 = vmatprep.subr.mxu0 0.0
      %894 = vmatpush1.msra.mxu0 0.0
      %895 = vmatprep.subr.mxu0 0.0
      %896 = vmatpush1.msra.mxu0 0.0
      %897 = vmatprep.mubr.f32.mxu0 0.0
      %898 = vmatmul.mubr.f32.gmra.mrb[0].mxu0 %v825
      %v899 = vpop.f32.mrb[0].mxu0
      %v900 = vadd.f32 %v810, %v899
      %v901 = vpop.f32.mrb[0].mxu0
      %902 = vmatprep.mubr.f32.mxu0 0.0
      %903 = vmatmul.mubr.f32.gmra.mrb[0].mxu0 %v828
      %v904 = vpop.f32.mrb[0].mxu0
      %v905 = vadd.f32 %v815, %v904
      %v906 = vpop.f32.mrb[0].mxu0
      %907 = vmatprep.mubr.f32.mxu0 0.0
      %908 = vmatmul.mubr.f32.gmra.mrb[0].mxu0 %v831
      %v909 = vpop.f32.mrb[0].mxu0
      %v910 = vadd.f32 %v820, %v909
      %v911 = vpop.f32.mrb[0].mxu0
      %912 = vdwg.mxu0
      %v913 = vld [vmem:[%s5] sm:$0x1]
      %v915 = vlaneseq
      %v916 = vshrl.u32 %v915, 7
      %v917 = vsub.s32 0, %v916
      %v918 = vrot.slane %v913, %v917
      %v920 = vadd.f32 %v900, %v918
      %v921 = vadd.f32 %v905, %v918
      %v922 = vadd.f32 %v910, %v918
      %v923 = vxor.u32 %v920, 2147483648
      %v924 = vxor.u32 %v921, 2147483648
      %v925 = vxor.u32 %v922, 2147483648
      %v926 = vmul.f32 %v923, 1.442695
      %v927 = vpow.pop %v926
      %v928 = vmul.f32 %v924, 1.442695
      %v929 = vpow.pop %v928
      %v930 = vmul.f32 %v925, 1.442695
      %v931 = vpow.pop %v930
      %v932 = vadd.f32 %v927, 1.0
      %v933 = vadd.f32 %v929, 1.0
      %v934 = vadd.f32 %v931, 1.0
      %v935 = vrcp.pop %v932
      %v936 = vmul.f32 1.0, %v935
      %v937 = vrcp.pop %v933
      %v938 = vmul.f32 1.0, %v937
      %v939 = vrcp.pop %v934
      %v940 = vmul.f32 1.0, %v939
      %v941 = vmul.f32 %v920, %v936
      %v942 = vmul.f32 %v921, %v938
      %v943 = vmul.f32 %v922, %v940
      %v944 = vld [vmem:[%s6] sm:$0xff]
      %v945 = vld [vmem:[%s6 + $0x8] sm:$0xff]
      %v946 = vld [vmem:[%s6 + $0x10] sm:$0xff]
      %v947 = vld [vmem:[%s6 + $0x18] sm:$0xff]
      %v948 = vld [vmem:[%s6 + $0x20] sm:$0xff]
      %v949 = vld [vmem:[%s6 + $0x28] sm:$0xff]
      %v950 = vld [vmem:[%s6 + $0x30] sm:$0xff]
      %v951 = vld [vmem:[%s6 + $0x38] sm:$0xff]
      %v952 = vld [vmem:[%s7] sm:$0x1]
      %v954 = vlaneseq
      %v955 = vshrl.u32 %v954, 7
      %v956 = vsub.s32 0, %v955
      %v957 = vrot.slane %v952, %v956
      %vm959 = vcmask 523264
      %v961 = vsel %vm959, %v941, 0
      %v964 = vsel %vm959, %v942, 0
      %v967 = vsel %vm959, %v943, 0
      %969 = vmatprep.subr.mxu0 0.0
      %970 = vmatpush1.msra.mxu0 %v944
      %971 = vmatprep.subr.mxu0 0.0
      %972 = vmatpush1.msra.mxu0 %v945
      %973 = vmatprep.subr.mxu0 0.0
      %974 = vmatpush1.msra.mxu0 %v946
      %975 = vmatprep.subr.mxu0 0.0
      %976 = vmatpush1.msra.mxu0 %v947
      %977 = vmatprep.subr.mxu0 0.0
      %978 = vmatpush1.msra.mxu0 %v948
      %979 = vmatprep.subr.mxu0 0.0
      %980 = vmatpush1.msra.mxu0 %v949
      %981 = vmatprep.subr.mxu0 0.0
      %982 = vmatpush1.msra.mxu0 %v950
      %983 = vmatprep.subr.mxu0 0.0
      %984 = vmatpush1.msra.mxu0 %v951
      %985 = vmatprep.subr.mxu0 0.0
      %986 = vmatpush1.msra.mxu0 0.0
      %987 = vmatprep.subr.mxu0 0.0
      %988 = vmatpush1.msra.mxu0 0.0
      %989 = vmatprep.subr.mxu0 0.0
      %990 = vmatpush1.msra.mxu0 0.0
      %991 = vmatprep.subr.mxu0 0.0
      %992 = vmatpush1.msra.mxu0 0.0
      %993 = vmatprep.subr.mxu0 0.0
      %994 = vmatpush1.msra.mxu0 0.0
      %995 = vmatprep.subr.mxu0 0.0
      %996 = vmatpush1.msra.mxu0 0.0
      %997 = vmatprep.subr.mxu0 0.0
      %998 = vmatpush1.msra.mxu0 0.0
      %999 = vmatprep.subr.mxu0 0.0
      %1000 = vmatpush1.msra.mxu0 0.0
      %1001 = vmatprep.subr.mxu0 0.0
      %1002 = vmatpush1.msra.mxu0 0.0
      %1003 = vmatprep.subr.mxu0 0.0
      %1004 = vmatpush1.msra.mxu0 0.0
      %1005 = vmatprep.subr.mxu0 0.0
      %1006 = vmatpush1.msra.mxu0 0.0
      %1007 = vmatprep.subr.mxu0 0.0
      %1008 = vmatpush1.msra.mxu0 0.0
      %1009 = vmatprep.subr.mxu0 0.0
      %1010 = vmatpush1.msra.mxu0 0.0
      %1011 = vmatprep.subr.mxu0 0.0
      %1012 = vmatpush1.msra.mxu0 0.0
      %1013 = vmatprep.subr.mxu0 0.0
      %1014 = vmatpush1.msra.mxu0 0.0
      %1015 = vmatprep.subr.mxu0 0.0
      %1016 = vmatpush1.msra.mxu0 0.0
      %1017 = vmatprep.subr.mxu0 0.0
      %1018 = vmatpush1.msra.mxu0 0.0
      %1019 = vmatprep.subr.mxu0 0.0
      %1020 = vmatpush1.msra.mxu0 0.0
      %1021 = vmatprep.subr.mxu0 0.0
      %1022 = vmatpush1.msra.mxu0 0.0
      %1023 = vmatprep.subr.mxu0 0.0
      %1024 = vmatpush1.msra.mxu0 0.0
      %1025 = vmatprep.subr.mxu0 0.0
      %1026 = vmatpush1.msra.mxu0 0.0
      %1027 = vmatprep.subr.mxu0 0.0
      %1028 = vmatpush1.msra.mxu0 0.0
      %1029 = vmatprep.subr.mxu0 0.0
      %1030 = vmatpush1.msra.mxu0 0.0
      %1031 = vmatprep.subr.mxu0 0.0
      %1032 = vmatpush1.msra.mxu0 0.0
      %1033 = vmatprep.mubr.f32.mxu0 0.0
      %1034 = vmatmul.mubr.f32.gmra.mrb[0].mxu0 %v961
      %v1035 = vpop.f32.mrb[0].mxu0
      %v1036 = vadd.f32 %v957, %v1035
      %v1037 = vpop.f32.mrb[0].mxu0
      %1038 = vmatprep.mubr.f32.mxu0 0.0
      %1039 = vmatmul.mubr.f32.gmra.mrb[0].mxu0 %v964
      %v1040 = vpop.f32.mrb[0].mxu0
      %v1041 = vadd.f32 %v957, %v1040
      %v1042 = vpop.f32.mrb[0].mxu0
      %1043 = vmatprep.mubr.f32.mxu0 0.0
      %1044 = vmatmul.mubr.f32.gmra.mrb[0].mxu0 %v967
      %v1045 = vpop.f32.mrb[0].mxu0
      %v1046 = vadd.f32 %v957, %v1045
      %v1047 = vpop.f32.mrb[0].mxu0
      %1048 = vdwg.mxu0
      %1050 = vset.pattern.permute.xlu0 0
      %1051 = vperm.xlu0 %1050, %v355
      %v1052 = vpop.permute.xlu0 %1051
      %1055 = vset.pattern.permute.xlu0 0
      %1056 = vperm.xlu0 %1055, %v356
      %v1057 = vpop.permute.xlu0 %1056
      %1060 = vset.pattern.permute.xlu0 0
      %1061 = vperm.xlu0 %1060, %v357
      %v1062 = vpop.permute.xlu0 %1061
      %v1064 = vmul.f32 %v1052, %v331
      %v1065 = vmul.f32 %v1057, %v332
      %v1066 = vmul.f32 %v1062, %v333
      %1068 = vset.pattern.permute.xlu0 0
      %1069 = vperm.xlu0 %1068, %v349
      %v1070 = vpop.permute.xlu0 %1069
      %1073 = vset.pattern.permute.xlu0 0
      %1074 = vperm.xlu0 %1073, %v350
      %v1075 = vpop.permute.xlu0 %1074
      %1078 = vset.pattern.permute.xlu0 0
      %1079 = vperm.xlu0 %1078, %v351
      %v1080 = vpop.permute.xlu0 %1079
      %v1082 = vmul.f32 %v1070, %v1036
      %v1083 = vmul.f32 %v1075, %v1041
      %v1084 = vmul.f32 %v1080, %v1046
      %v1085 = vadd.f32 %v1064, %v1082
      %v1086 = vadd.f32 %v1065, %v1083
      %v1087 = vadd.f32 %v1066, %v1084
      %1088 = vst.msk [vmem:[%s329] sm:$0xff] %vm823, %v1085
      %1089 = vst.msk [vmem:[%s329 + $0x8] sm:$0xff] %vm823, %v1086
      %1090 = vst.msk [vmem:[%s329 + $0x10] sm:$0xff] %vm823, %v1087
      %s1091 = smul.u32 3, %s19
      %p1092 = scmp.lt.s32.totalorder %s1091, 5
      %s1093 = scalar_select %p1092, %s1091, 5
      %s1094 = smul.addr %s1093, 8
      %s1095 = scalar_lea.vmem %s8, %s1094
      // Predicated region
      $region53: #{precond_forward.1} parent=51 // pred_check
        %p1096 = pneg %p215
      $region54: #{precond_forward.1} parent=51 // pred_check_branch
        %1098 = sbr.rel (%p1096) target = $region56
      $region55: #{precond_forward.1} parent=51 // pred_region
        %s1099 = smul.u32 3, %s19
      $region56: #{precond_forward.1} parent=51 // pred_fallthru
        _
    $region52: #{precond_forward.1} parent=5 // pred_fallthru
      _
    %p1100 = scmp.le.s32.totalorder 2, %s14
    // Predicated region
    $region57: #{precond_forward.1} parent=5 // pred_check
      %p1101 = pneg %p1100
    $region58: #{precond_forward.1} parent=5 // pred_check_branch
      %1103 = sbr.rel (%p1101) target = $region60
    $region59: #{precond_forward.1} parent=5 // pred_region
      %s1104 = ssub.s32 %s14, 2
      // Predicated region
      $region61: #{precond_forward.1} parent=59 // pred_check
        %p1105 = pneg %p221
      $region62: #{precond_forward.1} parent=59 // pred_check_branch
        %1107 = sbr.rel (%p1105) target = $region64
      $region63: #{precond_forward.1} parent=59 // pred_region
        %s1108 = smul.u32 3, %s20
        %p1109 = scmp.lt.s32.totalorder %s1108, 5
        %s1110 = scalar_select %p1109, %s1108, 5
        %s1111 = smul.addr %s1110, 8
        %s1112 = scalar_lea.vmem %s8, %s1111
      $region64: #{precond_forward.1} parent=59 // pred_fallthru
        _
    $region60: #{precond_forward.1} parent=5 // pred_fallthru
      _
  $region6: #{precond_forward.1} parent=0 // loop_footer
    %s18 = sadd.s32 1, %s14
  $region7: #{precond_forward.1} parent=0 // loop_footer_branch
    %13 = sbr.rel target = $region3
  $region8: #{precond_forward.1} parent=0 // loop_exit
    _

</llo_original>
